<compile_context>
chip_gen: v7x
topology: tpu7x:2x2x1
jax: 0.10.0
libtpu: 0.0.40
codegen_flags: <defaults>
</compile_context>

<pallas_src>
import numpy as np
import jax
import jax.numpy as jnp
from jax import lax
from jax.experimental import pallas as pl
from jax.experimental.pallas import tpu as pltpu

D = 15                      # latent dim
EPS = 1e-5                  # BatchNorm2d eps
H_IN = W_IN = 12            # fc expects 3*3*16 features -> 12 -> 6 -> 3 spatial
C1, C2 = 8, 16              # conv channel counts
S1 = (H_IN // 2) * (W_IN // 2)   # 36 conv1 output positions
S2 = (H_IN // 4) * (W_IN // 4)   # 9  conv2 output positions
F = S2 * C2                      # 144 flattened features


# ---------------------------------------------------------------- Pallas kernel

def encoder_fused_kernel(x_ref, a1_ref, b1_ref, a2_ref, g01_ref,
                         gamma_ref, beta_ref, wfc1_ref, bfc1_ref,
                         wfc2_ref, bfc2_ref, o_ref):
    x = x_ref[...]                                   # (N, 144)
    inv_count = 1.0 / (x.shape[0] * S2)              # 1 / (N * H2 * W2)

    # Conv2d(1->8, k3, s2, p1) + ReLU  (im2col folded into a1).
    y1 = jnp.maximum(
        jnp.dot(x, a1_ref[...], preferred_element_type=jnp.float32) + b1_ref[...],
        0.0)                                         # (N, 288), col = s1*8 + c1

    # Conv2d(8->16, k3, s2, p1), pre-BN.  Conv bias omitted: a per-channel
    # constant is exactly removed by BatchNorm's (x - batch_mean) centering.
    z2 = jnp.dot(y1, a2_ref[...],
                 preferred_element_type=jnp.float32)                   # (N, 144), col = s2*16 + c2

    # BatchNorm2d(16), training-mode biased stats over (N, H, W).
    # Channel of column i is i % 16; g01 broadcasts each per-channel sum back
    # to every column of that channel.  Two-pass (mean, then centered sq-sum)
    # avoids E[x^2]-E[x]^2 cancellation; z2/centered stay in registers.
    g01 = g01_ref[...]                                                  # (144, 144)
    colsum = jnp.sum(z2, axis=0, keepdims=True)                         # (1, 144)
    mean_b = jnp.dot(colsum, g01,
                     preferred_element_type=jnp.float32) * inv_count    # (1, 144)
    centered = z2 - mean_b
    sqsum = jnp.sum(centered * centered, axis=0, keepdims=True)
    var_b = jnp.dot(sqsum, g01,
                    preferred_element_type=jnp.float32) * inv_count
    y2 = jnp.maximum(
        centered * lax.rsqrt(var_b + EPS) * gamma_ref[...] + beta_ref[...], 0.0)
    # TODO(synk): running_mean/running_var buffer updates (BN training side-effects) not modeled.

    # Linear(144->128)+ReLU (NCHW-flatten permutation folded into wfc1), Linear(128->15).
    h = jnp.maximum(
        jnp.dot(y2, wfc1_ref[...], preferred_element_type=jnp.float32) + bfc1_ref[...],
        0.0)                                                            # (N, 128)
    o_ref[...] = jnp.dot(h, wfc2_ref[...],
                         preferred_element_type=jnp.float32) + bfc2_ref[...]


def _vmem():
    return pl.BlockSpec(memory_space=pltpu.MemorySpace.VMEM)


def encoder2l_forward(x_nchw, prep):
    n = x_nchw.shape[0]
    # Cin == 1, so the NCHW flatten equals the kernel's (hi*12 + wi) layout.
    x2d = x_nchw.reshape(n, H_IN * W_IN)
    args = (x2d, prep["a1"], prep["b1"], prep["a2"], prep["g01"],
            prep["gamma"], prep["beta"], prep["wfc1"], prep["bfc1"],
            prep["wfc2"], prep["bfc2"])
    return pl.pallas_call(
        encoder_fused_kernel,
        out_shape=jax.ShapeDtypeStruct((n, D), jnp.float32),
        in_specs=[_vmem() for _ in args],
        out_specs=_vmem(),
    )(*args)


# ------------------------------------------------- init-time parameter baking

def conv_as_matrix(w, h_in, w_in, stride, pad):
    """Fold im2col + conv weights into one dense matrix.

    Input columns:  (hi * w_in + wi) * Cin + ci   (spatial-major, channel-minor)
    Output columns: (ho * w_out + wo) * Cout + co
    Zero padding handled by omitting out-of-range taps.
    """
    w = np.asarray(w, np.float32)
    c_out, c_in, k, _ = w.shape
    h_out = (h_in + 2 * pad - k) // stride + 1
    w_out = (w_in + 2 * pad - k) // stride + 1
    a = np.zeros((h_in * w_in * c_in, h_out * w_out * c_out), np.float32)
    for co in range(c_out):
        for ho in range(h_out):
            for wo in range(w_out):
                col = (ho * w_out + wo) * c_out + co
                for ci in range(c_in):
                    for ky in range(k):
                        for kx in range(k):
                            hi = ho * stride + ky - pad
                            wi = wo * stride + kx - pad
                            if 0 <= hi < h_in and 0 <= wi < w_in:
                                a[(hi * w_in + wi) * c_in + ci, col] += w[co, ci, ky, kx]
    return a


def prepare_params(p):
    """Bake all layout work (im2col, flatten permutation, per-column broadcasts)
    into constants once at init.  Runtime forward then contains no layout ops.
    Note: conv2's bias is intentionally NOT exported -- it cancels exactly under
    training-mode BatchNorm."""
    a1 = conv_as_matrix(p["w1"], H_IN, W_IN, 2, 1)            # (144, 288)
    a2 = conv_as_matrix(p["w2"], H_IN // 2, W_IN // 2, 2, 1)  # (288, 144)

    # fc1 weight re-indexed from PyTorch flatten (f = c*9 + s) to the kernel's
    # column order (col = s*16 + c).
    wfc1 = np.asarray(p["wfc1"], np.float32)                  # (128, 144)
    wfc1p = np.zeros((F, 128), np.float32)
    for s in range(S2):
        for c in range(C2):
            wfc1p[s * C2 + c, :] = wfc1[:, c * S2 + s]

    # Per-channel -> per-column broadcast matrix for BN stats.
    cols = np.arange(F)
    g01 = (cols[:, None] % C2 == cols[None, :] % C2).astype(np.float32)

    as_row = lambda v: jnp.asarray(np.asarray(v, np.float32).reshape(1, -1))
    return dict(
        a1=jnp.asarray(a1), b1=as_row(np.tile(np.asarray(p["b1"]), S1)),
        a2=jnp.asarray(a2),
        g01=jnp.asarray(g01),
        gamma=as_row(np.tile(np.asarray(p["gamma"]), S2)),
        beta=as_row(np.tile(np.asarray(p["beta"]), S2)),
        wfc1=jnp.asarray(wfc1p), bfc1=as_row(p["bfc1"]),
        wfc2=jnp.asarray(np.asarray(p["wfc2"], np.float32).T), bfc2=as_row(p["bfc2"]),
    )


def init_params(key):
    ks = jax.random.split(key, 8)

    def uni(k, shape, fan_in):
        bound = 1.0 / float(fan_in) ** 0.5
        return jax.random.uniform(k, shape, jnp.float32, -bound, bound)

    return dict(
        w1=uni(ks[0], (C1, 1, 3, 3), 9),        b1=uni(ks[1], (C1,), 9),
        w2=uni(ks[2], (C2, C1, 3, 3), 72),      b2=uni(ks[3], (C2,), 72),
        gamma=jnp.ones((C2,), jnp.float32),     beta=jnp.zeros((C2,), jnp.float32),
        wfc1=uni(ks[4], (128, F), F),           bfc1=uni(ks[5], (128,), F),
        wfc2=uni(ks[6], (D, 128), 128),         bfc2=uni(ks[7], (D,), 128),
    )


# ---------------------------------------------------------------- reference

def reference_forward(x, p):
    """Pure-JAX replica of the PyTorch forward (training-mode BN, with conv2 bias)."""
    dn = ("NCHW", "OIHW", "NCHW")
    y = lax.conv_general_dilated(x, p["w1"], (2, 2), ((1, 1), (1, 1)),
                                 dimension_numbers=dn) + p["b1"][None, :, None, None]
    y = jnp.maximum(y, 0.0)
    y = lax.conv_general_dilated(y, p["w2"], (2, 2), ((1, 1), (1, 1)),
                                 dimension_numbers=dn) + p["b2"][None, :, None, None]
    mean = jnp.mean(y, axis=(0, 2, 3), keepdims=True)
    var = jnp.mean((y - mean) ** 2, axis=(0, 2, 3), keepdims=True)
    y = (y - mean) / jnp.sqrt(var + EPS)
    y = y * p["gamma"][None, :, None, None] + p["beta"][None, :, None, None]
    y = jnp.maximum(y, 0.0)
    f = y.reshape(y.shape[0], -1)
    h = jnp.maximum(f @ p["wfc1"].T + p["bfc1"], 0.0)
    return h @ p["wfc2"].T + p["bfc2"]


if __name__ == "__main__":
    key = jax.random.PRNGKey(0)
    k_x, k_p = jax.random.split(key)
    N = 8                                   # sublane-aligned small batch
    x = jax.random.normal(k_x, (N, 1, H_IN, W_IN), dtype=jnp.float32)
    raw = init_params(k_p)
    prep = prepare_params(raw)              # one-time layout baking at init

    fwd = jax.jit(encoder2l_forward)
    out = jax.block_until_ready(fwd(x, prep))
    ref = jax.block_until_ready(reference_forward(x, raw))

    assert out.shape == (N, D), out.shape
    err = float(jnp.max(jnp.abs(out - ref)))
    assert jnp.allclose(out, ref, rtol=1e-4, atol=1e-4), err
    print("KERNEL_OK")
</pallas_src>

<mosaic_0001>
module attributes {stable_mosaic.version = 11 : i64} {
  func.func @encoder_fused_kernel(%arg0: memref<8x144xf32, #tpu.memory_space<vmem>>, %arg1: memref<144x288xf32, #tpu.memory_space<vmem>>, %arg2: memref<1x288xf32, #tpu.memory_space<vmem>>, %arg3: memref<288x144xf32, #tpu.memory_space<vmem>>, %arg4: memref<144x144xf32, #tpu.memory_space<vmem>>, %arg5: memref<1x144xf32, #tpu.memory_space<vmem>>, %arg6: memref<1x144xf32, #tpu.memory_space<vmem>>, %arg7: memref<144x128xf32, #tpu.memory_space<vmem>>, %arg8: memref<1x128xf32, #tpu.memory_space<vmem>>, %arg9: memref<128x15xf32, #tpu.memory_space<vmem>>, %arg10: memref<1x15xf32, #tpu.memory_space<vmem>>, %arg11: memref<8x15xf32, #tpu.memory_space<vmem>>) attributes {dimension_semantics = [], scalar_prefetch = 0 : i64, scratch_operands = 0 : i64, tpu.core_type = #tpu.core_type<tc>} {
    %c0 = arith.constant 0 : index
    %c0_0 = arith.constant 0 : index
    %0 = vector.load %arg0[%c0, %c0_0] : memref<8x144xf32, #tpu.memory_space<vmem>>, vector<8x144xf32>
    %c0_1 = arith.constant 0 : index
    %c0_2 = arith.constant 0 : index
    %1 = vector.load %arg1[%c0_1, %c0_2] : memref<144x288xf32, #tpu.memory_space<vmem>>, vector<144x288xf32>
    %cst = arith.constant dense<0.000000e+00> : vector<8x288xf32>
    %2 = tpu.matmul %0, %1, %cst {dimension_numbers = #tpu.dot_dimension_numbers<[1], [0], [0], [1], [0, 0, 1, 1], [], []>} : vector<8x144xf32>, vector<144x288xf32>, vector<8x288xf32> -> vector<8x288xf32>
    %c0_3 = arith.constant 0 : index
    %c0_4 = arith.constant 0 : index
    %3 = vector.load %arg2[%c0_3, %c0_4] : memref<1x288xf32, #tpu.memory_space<vmem>>, vector<1x288xf32>
    %4 = vector.broadcast %3 : vector<1x288xf32> to vector<8x288xf32>
    %5 = arith.addf %2, %4 : vector<8x288xf32>
    %cst_5 = arith.constant 0.000000e+00 : f32
    %6 = vector.broadcast %cst_5 : f32 to vector<8x288xf32>
    %7 = arith.maximumf %5, %6 : vector<8x288xf32>
    %c0_6 = arith.constant 0 : index
    %c0_7 = arith.constant 0 : index
    %8 = vector.load %arg3[%c0_6, %c0_7] : memref<288x144xf32, #tpu.memory_space<vmem>>, vector<288x144xf32>
    %cst_8 = arith.constant dense<0.000000e+00> : vector<8x144xf32>
    %9 = tpu.matmul %7, %8, %cst_8 {dimension_numbers = #tpu.dot_dimension_numbers<[1], [0], [0], [1], [0, 0, 1, 1], [], []>} : vector<8x288xf32>, vector<288x144xf32>, vector<8x144xf32> -> vector<8x144xf32>
    %c0_9 = arith.constant 0 : index
    %c0_10 = arith.constant 0 : index
    %10 = vector.load %arg4[%c0_9, %c0_10] : memref<144x144xf32, #tpu.memory_space<vmem>>, vector<144x144xf32>
    %cst_11 = arith.constant dense<0.000000e+00> : vector<144xf32>
    %11 = vector.multi_reduction <add>, %9, %cst_11 [0] : vector<8x144xf32> to vector<144xf32>
    %12 = vector.shape_cast %11 : vector<144xf32> to vector<1x144xf32>
    %cst_12 = arith.constant dense<0.000000e+00> : vector<1x144xf32>
    %13 = tpu.matmul %12, %10, %cst_12 {dimension_numbers = #tpu.dot_dimension_numbers<[1], [0], [0], [1], [0, 0, 1, 1], [], []>} : vector<1x144xf32>, vector<144x144xf32>, vector<1x144xf32> -> vector<1x144xf32>
    %cst_13 = arith.constant 0.013888889 : f32
    %14 = vector.broadcast %cst_13 : f32 to vector<1x144xf32>
    %15 = arith.mulf %13, %14 : vector<1x144xf32>
    %16 = vector.broadcast %15 : vector<1x144xf32> to vector<8x144xf32>
    %17 = arith.subf %9, %16 : vector<8x144xf32>
    %18 = arith.mulf %17, %17 : vector<8x144xf32>
    %cst_14 = arith.constant dense<0.000000e+00> : vector<144xf32>
    %19 = vector.multi_reduction <add>, %18, %cst_14 [0] : vector<8x144xf32> to vector<144xf32>
    %20 = vector.shape_cast %19 : vector<144xf32> to vector<1x144xf32>
    %cst_15 = arith.constant dense<0.000000e+00> : vector<1x144xf32>
    %21 = tpu.matmul %20, %10, %cst_15 {dimension_numbers = #tpu.dot_dimension_numbers<[1], [0], [0], [1], [0, 0, 1, 1], [], []>} : vector<1x144xf32>, vector<144x144xf32>, vector<1x144xf32> -> vector<1x144xf32>
    %cst_16 = arith.constant 0.013888889 : f32
    %22 = vector.broadcast %cst_16 : f32 to vector<1x144xf32>
    %23 = arith.mulf %21, %22 : vector<1x144xf32>
    %cst_17 = arith.constant 9.99999974E-6 : f32
    %24 = vector.broadcast %cst_17 : f32 to vector<1x144xf32>
    %25 = arith.addf %23, %24 : vector<1x144xf32>
    %26 = math.rsqrt %25 : vector<1x144xf32>
    %27 = vector.broadcast %26 : vector<1x144xf32> to vector<8x144xf32>
    %28 = arith.mulf %17, %27 : vector<8x144xf32>
    %c0_18 = arith.constant 0 : index
    %c0_19 = arith.constant 0 : index
    %29 = vector.load %arg5[%c0_18, %c0_19] : memref<1x144xf32, #tpu.memory_space<vmem>>, vector<1x144xf32>
    %30 = vector.broadcast %29 : vector<1x144xf32> to vector<8x144xf32>
    %31 = arith.mulf %28, %30 : vector<8x144xf32>
    %c0_20 = arith.constant 0 : index
    %c0_21 = arith.constant 0 : index
    %32 = vector.load %arg6[%c0_20, %c0_21] : memref<1x144xf32, #tpu.memory_space<vmem>>, vector<1x144xf32>
    %33 = vector.broadcast %32 : vector<1x144xf32> to vector<8x144xf32>
    %34 = arith.addf %31, %33 : vector<8x144xf32>
    %cst_22 = arith.constant 0.000000e+00 : f32
    %35 = vector.broadcast %cst_22 : f32 to vector<8x144xf32>
    %36 = arith.maximumf %34, %35 : vector<8x144xf32>
    %c0_23 = arith.constant 0 : index
    %c0_24 = arith.constant 0 : index
    %37 = vector.load %arg7[%c0_23, %c0_24] : memref<144x128xf32, #tpu.memory_space<vmem>>, vector<144x128xf32>
    %cst_25 = arith.constant dense<0.000000e+00> : vector<8x128xf32>
    %38 = tpu.matmul %36, %37, %cst_25 {dimension_numbers = #tpu.dot_dimension_numbers<[1], [0], [0], [1], [0, 0, 1, 1], [], []>} : vector<8x144xf32>, vector<144x128xf32>, vector<8x128xf32> -> vector<8x128xf32>
    %c0_26 = arith.constant 0 : index
    %c0_27 = arith.constant 0 : index
    %39 = vector.load %arg8[%c0_26, %c0_27] : memref<1x128xf32, #tpu.memory_space<vmem>>, vector<1x128xf32>
    %40 = vector.broadcast %39 : vector<1x128xf32> to vector<8x128xf32>
    %41 = arith.addf %38, %40 : vector<8x128xf32>
    %cst_28 = arith.constant 0.000000e+00 : f32
    %42 = vector.broadcast %cst_28 : f32 to vector<8x128xf32>
    %43 = arith.maximumf %41, %42 : vector<8x128xf32>
    %c0_29 = arith.constant 0 : index
    %c0_30 = arith.constant 0 : index
    %44 = vector.load %arg9[%c0_29, %c0_30] : memref<128x15xf32, #tpu.memory_space<vmem>>, vector<128x15xf32>
    %cst_31 = arith.constant dense<0.000000e+00> : vector<8x15xf32>
    %45 = tpu.matmul %43, %44, %cst_31 {dimension_numbers = #tpu.dot_dimension_numbers<[1], [0], [0], [1], [0, 0, 1, 1], [], []>} : vector<8x128xf32>, vector<128x15xf32>, vector<8x15xf32> -> vector<8x15xf32>
    %c0_32 = arith.constant 0 : index
    %c0_33 = arith.constant 0 : index
    %46 = vector.load %arg10[%c0_32, %c0_33] : memref<1x15xf32, #tpu.memory_space<vmem>>, vector<1x15xf32>
    %47 = vector.broadcast %46 : vector<1x15xf32> to vector<8x15xf32>
    %48 = arith.addf %45, %47 : vector<8x15xf32>
    %c0_34 = arith.constant 0 : index
    %c0_35 = arith.constant 0 : index
    %49 = vector.load %arg11[%c0_34, %c0_35] : memref<8x15xf32, #tpu.memory_space<vmem>>, vector<8x15xf32>
    tpu.vector_store %arg11[%c0_34, %c0_35], %48 {strides = array<i32>} : memref<8x15xf32, #tpu.memory_space<vmem>>, vector<8x15xf32>,
    return
  }
}

</mosaic_0001>

<llo_original>
// kernel: encoder2l_forward.1
$region0: #{encoder2l_forward.1}
  #allocation0 [shape = 'u32[]', space=smem, size = 0x4, offset = 0x4, fixed_abs, tag = 'smem constant byte address 0x4 - core index']
  #allocation1 [shape = 'u32[144,128]{1,0:T(1,128)}', space=vmem, size = 0x12000, scoped, tag = 'internal scratch']
  %s0 = inlined_call_operand.vmem [shape: f32[8,144], index: 0, kind: input, shape index: {}]
  %s1 = inlined_call_operand.vmem [shape: f32[144,288], index: 1, kind: input, shape index: {}]
  %s2 = inlined_call_operand.vmem [shape: f32[1,288], index: 2, kind: input, shape index: {}]
  %s3 = inlined_call_operand.vmem [shape: f32[288,144], index: 3, kind: input, shape index: {}]
  %s4 = inlined_call_operand.vmem [shape: f32[144,144], index: 4, kind: input, shape index: {}]
  %s5 = inlined_call_operand.vmem [shape: f32[1,144], index: 5, kind: input, shape index: {}]
  %s6 = inlined_call_operand.vmem [shape: f32[1,144], index: 6, kind: input, shape index: {}]
  %s7 = inlined_call_operand.vmem [shape: f32[144,128], index: 7, kind: input, shape index: {}]
  %s8 = inlined_call_operand.vmem [shape: f32[1,128], index: 8, kind: input, shape index: {}]
  %s9 = inlined_call_operand.vmem [shape: f32[128,15], index: 9, kind: input, shape index: {}]
  %s10 = inlined_call_operand.vmem [shape: f32[1,15], index: 10, kind: input, shape index: {}]
  %s11 = inlined_call_operand.hbm [shape: f32[8,15], index: 11, kind: output, shape index: {}]
  %s12 = sld [smem:[#allocation0]]
  $region54: #{encoder2l_forward.1} parent=0
    _
  %s14 = ssub.s32 1, %s12
  %s15 = scalar_select 0, %s14, %s12
  $region1: #{encoder2l_forward.1} parent=0
    #allocation2 [shape = 'u8[4096]{0}', space=vmem, size = 0x1000, scoped, tag = 'output window, operand 0, single buffered']
    #allocation3 [shape = 's32[1]{0}', space=sflag, size = 0x4, scoped, tag = 'scoped memory for encoder2l_forward.1']
    %16 = vsyncpa [#allocation3], 0
    // Predicated region
    $region2: #{encoder2l_forward.1} parent=1 // pred_check
      _
    $region3: #{encoder2l_forward.1} parent=1 // pred_check_branch
      %18 = sbr.rel (0) target = $region5
    $region4: #{encoder2l_forward.1} parent=1 // pred_region
      _
    $region5: #{encoder2l_forward.1} parent=1 // pred_fallthru
      _
    // Predicated region
    $region6: #{encoder2l_forward.1} parent=1 // pred_check
      _
    $region7: #{encoder2l_forward.1} parent=1 // pred_check_branch
      %20 = sbr.rel (0) target = $region9
    $region8: #{encoder2l_forward.1} parent=1 // pred_region
      _
    $region9: #{encoder2l_forward.1} parent=1 // pred_fallthru
      _
    // Predicated region
    $region10: #{encoder2l_forward.1} parent=1 // pred_check
      _
    $region11: #{encoder2l_forward.1} parent=1 // pred_check_branch
      %22 = sbr.rel (0) target = $region13
    $region12: #{encoder2l_forward.1} parent=1 // pred_region
      _
    $region13: #{encoder2l_forward.1} parent=1 // pred_fallthru
      _
    // Predicated region
    $region14: #{encoder2l_forward.1} parent=1 // pred_check
      _
    $region15: #{encoder2l_forward.1} parent=1 // pred_check_branch
      %24 = sbr.rel (0) target = $region17
    $region16: #{encoder2l_forward.1} parent=1 // pred_region
      _
    $region17: #{encoder2l_forward.1} parent=1 // pred_fallthru
      _
    // Predicated region
    $region18: #{encoder2l_forward.1} parent=1 // pred_check
      _
    $region19: #{encoder2l_forward.1} parent=1 // pred_check_branch
      %26 = sbr.rel (0) target = $region21
    $region20: #{encoder2l_forward.1} parent=1 // pred_region
      _
    $region21: #{encoder2l_forward.1} parent=1 // pred_fallthru
      _
    // Predicated region
    $region22: #{encoder2l_forward.1} parent=1 // pred_check
      _
    $region23: #{encoder2l_forward.1} parent=1 // pred_check_branch
      %28 = sbr.rel (0) target = $region25
    $region24: #{encoder2l_forward.1} parent=1 // pred_region
      _
    $region25: #{encoder2l_forward.1} parent=1 // pred_fallthru
      _
    // Predicated region
    $region26: #{encoder2l_forward.1} parent=1 // pred_check
      _
    $region27: #{encoder2l_forward.1} parent=1 // pred_check_branch
      %30 = sbr.rel (0) target = $region29
    $region28: #{encoder2l_forward.1} parent=1 // pred_region
      _
    $region29: #{encoder2l_forward.1} parent=1 // pred_fallthru
      _
    // Predicated region
    $region30: #{encoder2l_forward.1} parent=1 // pred_check
      _
    $region31: #{encoder2l_forward.1} parent=1 // pred_check_branch
      %32 = sbr.rel (0) target = $region33
    $region32: #{encoder2l_forward.1} parent=1 // pred_region
      _
    $region33: #{encoder2l_forward.1} parent=1 // pred_fallthru
      _
    // Predicated region
    $region34: #{encoder2l_forward.1} parent=1 // pred_check
      _
    $region35: #{encoder2l_forward.1} parent=1 // pred_check_branch
      %34 = sbr.rel (0) target = $region37
    $region36: #{encoder2l_forward.1} parent=1 // pred_region
      _
    $region37: #{encoder2l_forward.1} parent=1 // pred_fallthru
      _
    // Predicated region
    $region38: #{encoder2l_forward.1} parent=1 // pred_check
      _
    $region39: #{encoder2l_forward.1} parent=1 // pred_check_branch
      %36 = sbr.rel (0) target = $region41
    $region40: #{encoder2l_forward.1} parent=1 // pred_region
      _
    $region41: #{encoder2l_forward.1} parent=1 // pred_fallthru
      _
    // Predicated region
    $region42: #{encoder2l_forward.1} parent=1 // pred_check
      _
    $region43: #{encoder2l_forward.1} parent=1 // pred_check_branch
      %38 = sbr.rel (0) target = $region45
    $region44: #{encoder2l_forward.1} parent=1 // pred_region
      _
    $region45: #{encoder2l_forward.1} parent=1 // pred_fallthru
      _
    %v39 = vld [vmem:[%s0] sm:$0xff]
    %v40 = vld [vmem:[%s0 + $0x8] sm:$0xff]
    %v41 = vld [vmem:[%s1] sm:$0xff]
    %v42 = vld [vmem:[%s1 + $0x8] sm:$0xff]
    %v43 = vld [vmem:[%s1 + $0x10] sm:$0xff]
    %v44 = vld [vmem:[%s1 + $0x18] sm:$0xff]
    %v45 = vld [vmem:[%s1 + $0x20] sm:$0xff]
    %v46 = vld [vmem:[%s1 + $0x28] sm:$0xff]
    %v47 = vld [vmem:[%s1 + $0x30] sm:$0xff]
    %v48 = vld [vmem:[%s1 + $0x38] sm:$0xff]
    %v49 = vld [vmem:[%s1 + $0x40] sm:$0xff]
    %v50 = vld [vmem:[%s1 + $0x48] sm:$0xff]
    %v51 = vld [vmem:[%s1 + $0x50] sm:$0xff]
    %v52 = vld [vmem:[%s1 + $0x58] sm:$0xff]
    %v53 = vld [vmem:[%s1 + $0x60] sm:$0xff]
    %v54 = vld [vmem:[%s1 + $0x68] sm:$0xff]
    %v55 = vld [vmem:[%s1 + $0x70] sm:$0xff]
    %v56 = vld [vmem:[%s1 + $0x78] sm:$0xff]
    %v57 = vld [vmem:[%s1 + $0x80] sm:$0xff]
    %v58 = vld [vmem:[%s1 + $0x88] sm:$0xff]
    %v59 = vld [vmem:[%s1 + $0x90] sm:$0xff]
    %v60 = vld [vmem:[%s1 + $0x98] sm:$0xff]
    %v61 = vld [vmem:[%s1 + $0xa0] sm:$0xff]
    %v62 = vld [vmem:[%s1 + $0xa8] sm:$0xff]
    %v63 = vld [vmem:[%s1 + $0xb0] sm:$0xff]
    %v64 = vld [vmem:[%s1 + $0xb8] sm:$0xff]
    %v65 = vld [vmem:[%s1 + $0xc0] sm:$0xff]
    %v66 = vld [vmem:[%s1 + $0xc8] sm:$0xff]
    %v67 = vld [vmem:[%s1 + $0xd0] sm:$0xff]
    %v68 = vld [vmem:[%s1 + $0xd8] sm:$0xff]
    %v69 = vld [vmem:[%s1 + $0xe0] sm:$0xff]
    %v70 = vld [vmem:[%s1 + $0xe8] sm:$0xff]
    %v71 = vld [vmem:[%s1 + $0xf0] sm:$0xff]
    %v72 = vld [vmem:[%s1 + $0xf8] sm:$0xff]
    %v73 = vld [vmem:[%s1 + $0x100] sm:$0xff]
    %v74 = vld [vmem:[%s1 + $0x108] sm:$0xff]
    %v75 = vld [vmem:[%s1 + $0x110] sm:$0xff]
    %v76 = vld [vmem:[%s1 + $0x118] sm:$0xff]
    %v77 = vld [vmem:[%s1 + $0x120] sm:$0xff]
    %v78 = vld [vmem:[%s1 + $0x128] sm:$0xff]
    %v79 = vld [vmem:[%s1 + $0x130] sm:$0xff]
    %v80 = vld [vmem:[%s1 + $0x138] sm:$0xff]
    %v81 = vld [vmem:[%s1 + $0x140] sm:$0xff]
    %v82 = vld [vmem:[%s1 + $0x148] sm:$0xff]
    %v83 = vld [vmem:[%s1 + $0x150] sm:$0xff]
    %v84 = vld [vmem:[%s1 + $0x158] sm:$0xff]
    %v85 = vld [vmem:[%s1 + $0x160] sm:$0xff]
    %v86 = vld [vmem:[%s1 + $0x168] sm:$0xff]
    %v87 = vld [vmem:[%s1 + $0x170] sm:$0xff]
    %v88 = vld [vmem:[%s1 + $0x178] sm:$0xff]
    %v89 = vld [vmem:[%s1 + $0x180] sm:$0xff]
    %v90 = vld [vmem:[%s1 + $0x188] sm:$0xff]
    %v91 = vld [vmem:[%s1 + $0x190] sm:$0xff]
    %v92 = vld [vmem:[%s1 + $0x198] sm:$0xff]
    %v93 = vld [vmem:[%s1 + $0x1a0] sm:$0xff]
    %v94 = vld [vmem:[%s1 + $0x1a8] sm:$0xff]
    %v95 = vld [vmem:[%s2] sm:$0x7]
    %v97 = vlaneseq
    %v98 = vshrl.u32 %v97, 7
    %v99 = vsub.s32 0, %v98
    %v100 = vrot.slane %v95, %v99
    %v101 = vlaneseq
    %v102 = vshrl.u32 %v101, 7
    %v103 = vsub.s32 1, %v102
    %v104 = vrot.slane %v95, %v103
    %v105 = vlaneseq
    %v106 = vshrl.u32 %v105, 7
    %v107 = vsub.s32 2, %v106
    %v108 = vrot.slane %v95, %v107
    %vm112 = vcmask 130048
    %v114 = vsel %vm112, %v40, 0
    %116 = vmatprep.subr.mxu0 %v42
    %117 = vmatpush1.msra.mxu0 %v41
    %118 = vmatprep.subr.mxu0 %v45
    %119 = vmatpush1.msra.mxu0 %v44
    %120 = vmatprep.subr.mxu0 %v48
    %121 = vmatpush1.msra.mxu0 %v47
    %122 = vmatprep.subr.mxu0 %v51
    %123 = vmatpush1.msra.mxu0 %v50
    %124 = vmatprep.subr.mxu0 %v54
    %125 = vmatpush1.msra.mxu0 %v53
    %126 = vmatprep.subr.mxu0 %v57
    %127 = vmatpush1.msra.mxu0 %v56
    %128 = vmatprep.subr.mxu0 %v60
    %129 = vmatpush1.msra.mxu0 %v59
    %130 = vmatprep.subr.mxu0 %v63
    %131 = vmatpush1.msra.mxu0 %v62
    %132 = vmatprep.subr.mxu0 %v66
    %133 = vmatpush1.msra.mxu0 %v65
    %134 = vmatprep.subr.mxu0 %v69
    %135 = vmatpush1.msra.mxu0 %v68
    %136 = vmatprep.subr.mxu0 %v72
    %137 = vmatpush1.msra.mxu0 %v71
    %138 = vmatprep.subr.mxu0 %v75
    %139 = vmatpush1.msra.mxu0 %v74
    %140 = vmatprep.subr.mxu0 %v78
    %141 = vmatpush1.msra.mxu0 %v77
    %142 = vmatprep.subr.mxu0 %v81
    %143 = vmatpush1.msra.mxu0 %v80
    %144 = vmatprep.subr.mxu0 %v84
    %145 = vmatpush1.msra.mxu0 %v83
    %146 = vmatprep.subr.mxu0 %v87
    %147 = vmatpush1.msra.mxu0 %v86
    %148 = vmatprep.subr.mxu0 %v90
    %149 = vmatpush1.msra.mxu0 %v89
    %150 = vmatprep.subr.mxu0 %v93
    %151 = vmatpush1.msra.mxu0 %v92
    %152 = vmatprep.subr.mxu0 0.0
    %153 = vmatpush1.msra.mxu0 0.0
    %154 = vmatprep.subr.mxu0 0.0
    %155 = vmatpush1.msra.mxu0 0.0
    %156 = vmatprep.subr.mxu0 0.0
    %157 = vmatpush1.msra.mxu0 0.0
    %158 = vmatprep.subr.mxu0 0.0
    %159 = vmatpush1.msra.mxu0 0.0
    %160 = vmatprep.subr.mxu0 0.0
    %161 = vmatpush1.msra.mxu0 0.0
    %162 = vmatprep.subr.mxu0 0.0
    %163 = vmatpush1.msra.mxu0 0.0
    %164 = vmatprep.subr.mxu0 0.0
    %165 = vmatpush1.msra.mxu0 0.0
    %166 = vmatprep.subr.mxu0 0.0
    %167 = vmatpush1.msra.mxu0 0.0
    %168 = vmatprep.subr.mxu0 0.0
    %169 = vmatpush1.msra.mxu0 0.0
    %170 = vmatprep.subr.mxu0 0.0
    %171 = vmatpush1.msra.mxu0 0.0
    %172 = vmatprep.subr.mxu0 0.0
    %173 = vmatpush1.msra.mxu0 0.0
    %174 = vmatprep.subr.mxu0 0.0
    %175 = vmatpush1.msra.mxu0 0.0
    %176 = vmatprep.subr.mxu0 0.0
    %177 = vmatpush1.msra.mxu0 0.0
    %178 = vmatprep.subr.mxu0 0.0
    %179 = vmatpush1.msra.mxu0 0.0
    %180 = vmatprep.mubr.f32.mxu0 %v114
    %181 = vmatmul.mubr.f32.gmra.mrb[0].mxu0 %v39
    %v182 = vpop.f32.mrb[0].mxu0
    %v183 = vadd.f32 %v100, %v182
    %v184 = vpop.f32.mrb[0].mxu0
    %v185 = vadd.f32 %v104, %v184
    %186 = vdwg.mxu0
    %187 = vmatprep.subr.mxu0 0.0
    %188 = vmatpush1.msra.mxu0 %v43
    %189 = vmatprep.subr.mxu0 0.0
    %190 = vmatpush1.msra.mxu0 %v46
    %191 = vmatprep.subr.mxu0 0.0
    %192 = vmatpush1.msra.mxu0 %v49
    %193 = vmatprep.subr.mxu0 0.0
    %194 = vmatpush1.msra.mxu0 %v52
    %195 = vmatprep.subr.mxu0 0.0
    %196 = vmatpush1.msra.mxu0 %v55
    %197 = vmatprep.subr.mxu0 0.0
    %198 = vmatpush1.msra.mxu0 %v58
    %199 = vmatprep.subr.mxu0 0.0
    %200 = vmatpush1.msra.mxu0 %v61
    %201 = vmatprep.subr.mxu0 0.0
    %202 = vmatpush1.msra.mxu0 %v64
    %203 = vmatprep.subr.mxu0 0.0
    %204 = vmatpush1.msra.mxu0 %v67
    %205 = vmatprep.subr.mxu0 0.0
    %206 = vmatpush1.msra.mxu0 %v70
    %207 = vmatprep.subr.mxu0 0.0
    %208 = vmatpush1.msra.mxu0 %v73
    %209 = vmatprep.subr.mxu0 0.0
    %210 = vmatpush1.msra.mxu0 %v76
    %211 = vmatprep.subr.mxu0 0.0
    %212 = vmatpush1.msra.mxu0 %v79
    %213 = vmatprep.subr.mxu0 0.0
    %214 = vmatpush1.msra.mxu0 %v82
    %215 = vmatprep.subr.mxu0 0.0
    %216 = vmatpush1.msra.mxu0 %v85
    %217 = vmatprep.subr.mxu0 0.0
    %218 = vmatpush1.msra.mxu0 %v88
    %219 = vmatprep.subr.mxu0 0.0
    %220 = vmatpush1.msra.mxu0 %v91
    %221 = vmatprep.subr.mxu0 0.0
    %222 = vmatpush1.msra.mxu0 %v94
    %223 = vmatprep.subr.mxu0 0.0
    %224 = vmatpush1.msra.mxu0 0.0
    %225 = vmatprep.subr.mxu0 0.0
    %226 = vmatpush1.msra.mxu0 0.0
    %227 = vmatprep.subr.mxu0 0.0
    %228 = vmatpush1.msra.mxu0 0.0
    %229 = vmatprep.subr.mxu0 0.0
    %230 = vmatpush1.msra.mxu0 0.0
    %231 = vmatprep.subr.mxu0 0.0
    %232 = vmatpush1.msra.mxu0 0.0
    %233 = vmatprep.subr.mxu0 0.0
    %234 = vmatpush1.msra.mxu0 0.0
    %235 = vmatprep.subr.mxu0 0.0
    %236 = vmatpush1.msra.mxu0 0.0
    %237 = vmatprep.subr.mxu0 0.0
    %238 = vmatpush1.msra.mxu0 0.0
    %239 = vmatprep.subr.mxu0 0.0
    %240 = vmatpush1.msra.mxu0 0.0
    %241 = vmatprep.subr.mxu0 0.0
    %242 = vmatpush1.msra.mxu0 0.0
    %243 = vmatprep.subr.mxu0 0.0
    %244 = vmatpush1.msra.mxu0 0.0
    %245 = vmatprep.subr.mxu0 0.0
    %246 = vmatpush1.msra.mxu0 0.0
    %247 = vmatprep.subr.mxu0 0.0
    %248 = vmatpush1.msra.mxu0 0.0
    %249 = vmatprep.subr.mxu0 0.0
    %250 = vmatpush1.msra.mxu0 0.0
    %251 = vmatprep.mubr.f32.mxu0 %v114
    %252 = vmatmul.mubr.f32.gmra.mrb[0].mxu0 %v39
    %v253 = vpop.f32.mrb[0].mxu0
    %v254 = vadd.f32 %v108, %v253
    %v255 = vpop.f32.mrb[0].mxu0
    %256 = vdwg.mxu0
    %v257 = vmax.f32 %v183, 0.0
    %v258 = vmax.f32 %v185, 0.0
    %v259 = vmax.f32 %v254, 0.0
    %v260 = vld [vmem:[%s3] sm:$0xff]
    %v261 = vld [vmem:[%s3 + $0x8] sm:$0xff]
    %v262 = vld [vmem:[%s3 + $0x10] sm:$0xff]
    %v263 = vld [vmem:[%s3 + $0x18] sm:$0xff]
    %v264 = vld [vmem:[%s3 + $0x20] sm:$0xff]
    %v265 = vld [vmem:[%s3 + $0x28] sm:$0xff]
    %v266 = vld [vmem:[%s3 + $0x30] sm:$0xff]
    %v267 = vld [vmem:[%s3 + $0x38] sm:$0xff]
    %v268 = vld [vmem:[%s3 + $0x40] sm:$0xff]
    %v269 = vld [vmem:[%s3 + $0x48] sm:$0xff]
    %v270 = vld [vmem:[%s3 + $0x50] sm:$0xff]
    %v271 = vld [vmem:[%s3 + $0x58] sm:$0xff]
    %v272 = vld [vmem:[%s3 + $0x60] sm:$0xff]
    %v273 = vld [vmem:[%s3 + $0x68] sm:$0xff]
    %v274 = vld [vmem:[%s3 + $0x70] sm:$0xff]
    %v275 = vld [vmem:[%s3 + $0x78] sm:$0xff]
    %v276 = vld [vmem:[%s3 + $0x80] sm:$0xff]
    %v277 = vld [vmem:[%s3 + $0x88] sm:$0xff]
    %v278 = vld [vmem:[%s3 + $0x90] sm:$0xff]
    %v279 = vld [vmem:[%s3 + $0x98] sm:$0xff]
    %v280 = vld [vmem:[%s3 + $0xa0] sm:$0xff]
    %v281 = vld [vmem:[%s3 + $0xa8] sm:$0xff]
    %v282 = vld [vmem:[%s3 + $0xb0] sm:$0xff]
    %v283 = vld [vmem:[%s3 + $0xb8] sm:$0xff]
    %v284 = vld [vmem:[%s3 + $0xc0] sm:$0xff]
    %v285 = vld [vmem:[%s3 + $0xc8] sm:$0xff]
    %v286 = vld [vmem:[%s3 + $0xd0] sm:$0xff]
    %v287 = vld [vmem:[%s3 + $0xd8] sm:$0xff]
    %v288 = vld [vmem:[%s3 + $0xe0] sm:$0xff]
    %v289 = vld [vmem:[%s3 + $0xe8] sm:$0xff]
    %v290 = vld [vmem:[%s3 + $0xf0] sm:$0xff]
    %v291 = vld [vmem:[%s3 + $0xf8] sm:$0xff]
    %v292 = vld [vmem:[%s3 + $0x100] sm:$0xff]
    %v293 = vld [vmem:[%s3 + $0x108] sm:$0xff]
    %v294 = vld [vmem:[%s3 + $0x110] sm:$0xff]
    %v295 = vld [vmem:[%s3 + $0x118] sm:$0xff]
    %v296 = vld [vmem:[%s3 + $0x120] sm:$0xff]
    %v297 = vld [vmem:[%s3 + $0x128] sm:$0xff]
    %v298 = vld [vmem:[%s3 + $0x130] sm:$0xff]
    %v299 = vld [vmem:[%s3 + $0x138] sm:$0xff]
    %v300 = vld [vmem:[%s3 + $0x140] sm:$0xff]
    %v301 = vld [vmem:[%s3 + $0x148] sm:$0xff]
    %v302 = vld [vmem:[%s3 + $0x150] sm:$0xff]
    %v303 = vld [vmem:[%s3 + $0x158] sm:$0xff]
    %v304 = vld [vmem:[%s3 + $0x160] sm:$0xff]
    %v305 = vld [vmem:[%s3 + $0x168] sm:$0xff]
    %v306 = vld [vmem:[%s3 + $0x170] sm:$0xff]
    %v307 = vld [vmem:[%s3 + $0x178] sm:$0xff]
    %v308 = vld [vmem:[%s3 + $0x180] sm:$0xff]
    %v309 = vld [vmem:[%s3 + $0x188] sm:$0xff]
    %v310 = vld [vmem:[%s3 + $0x190] sm:$0xff]
    %v311 = vld [vmem:[%s3 + $0x198] sm:$0xff]
    %v312 = vld [vmem:[%s3 + $0x1a0] sm:$0xff]
    %v313 = vld [vmem:[%s3 + $0x1a8] sm:$0xff]
    %v314 = vld [vmem:[%s3 + $0x1b0] sm:$0xff]
    %v315 = vld [vmem:[%s3 + $0x1b8] sm:$0xff]
    %v316 = vld [vmem:[%s3 + $0x1c0] sm:$0xff]
    %v317 = vld [vmem:[%s3 + $0x1c8] sm:$0xff]
    %v318 = vld [vmem:[%s3 + $0x1d0] sm:$0xff]
    %v319 = vld [vmem:[%s3 + $0x1d8] sm:$0xff]
    %v320 = vld [vmem:[%s3 + $0x1e0] sm:$0xff]
    %v321 = vld [vmem:[%s3 + $0x1e8] sm:$0xff]
    %v322 = vld [vmem:[%s3 + $0x1f0] sm:$0xff]
    %v323 = vld [vmem:[%s3 + $0x1f8] sm:$0xff]
    %v324 = vld [vmem:[%s3 + $0x200] sm:$0xff]
    %v325 = vld [vmem:[%s3 + $0x208] sm:$0xff]
    %v326 = vld [vmem:[%s3 + $0x210] sm:$0xff]
    %v327 = vld [vmem:[%s3 + $0x218] sm:$0xff]
    %v328 = vld [vmem:[%s3 + $0x220] sm:$0xff]
    %v329 = vld [vmem:[%s3 + $0x228] sm:$0xff]
    %v330 = vld [vmem:[%s3 + $0x230] sm:$0xff]
    %v331 = vld [vmem:[%s3 + $0x238] sm:$0xff]
    %vm332 = vcmask 261120
    %v334 = vsel %vm332, %v259, 0
    %336 = vmatprep.subr.mxu0 %v261
    %337 = vmatpush1.msra.mxu0 %v260
    %338 = vmatprep.subr.mxu0 %v263
    %339 = vmatpush1.msra.mxu0 %v262
    %340 = vmatprep.subr.mxu0 %v265
    %341 = vmatpush1.msra.mxu0 %v264
    %342 = vmatprep.subr.mxu0 %v267
    %343 = vmatpush1.msra.mxu0 %v266
    %344 = vmatprep.subr.mxu0 %v269
    %345 = vmatpush1.msra.mxu0 %v268
    %346 = vmatprep.subr.mxu0 %v271
    %347 = vmatpush1.msra.mxu0 %v270
    %348 = vmatprep.subr.mxu0 %v273
    %349 = vmatpush1.msra.mxu0 %v272
    %350 = vmatprep.subr.mxu0 %v275
    %351 = vmatpush1.msra.mxu0 %v274
    %352 = vmatprep.subr.mxu0 %v277
    %353 = vmatpush1.msra.mxu0 %v276
    %354 = vmatprep.subr.mxu0 %v279
    %355 = vmatpush1.msra.mxu0 %v278
    %356 = vmatprep.subr.mxu0 %v281
    %357 = vmatpush1.msra.mxu0 %v280
    %358 = vmatprep.subr.mxu0 %v283
    %359 = vmatpush1.msra.mxu0 %v282
    %360 = vmatprep.subr.mxu0 %v285
    %361 = vmatpush1.msra.mxu0 %v284
    %362 = vmatprep.subr.mxu0 %v287
    %363 = vmatpush1.msra.mxu0 %v286
    %364 = vmatprep.subr.mxu0 %v289
    %365 = vmatpush1.msra.mxu0 %v288
    %366 = vmatprep.subr.mxu0 %v291
    %367 = vmatpush1.msra.mxu0 %v290
    %368 = vmatprep.subr.mxu0 %v293
    %369 = vmatpush1.msra.mxu0 %v292
    %370 = vmatprep.subr.mxu0 %v295
    %371 = vmatpush1.msra.mxu0 %v294
    %372 = vmatprep.subr.mxu0 %v297
    %373 = vmatpush1.msra.mxu0 %v296
    %374 = vmatprep.subr.mxu0 %v299
    %375 = vmatpush1.msra.mxu0 %v298
    %376 = vmatprep.subr.mxu0 %v301
    %377 = vmatpush1.msra.mxu0 %v300
    %378 = vmatprep.subr.mxu0 %v303
    %379 = vmatpush1.msra.mxu0 %v302
    %380 = vmatprep.subr.mxu0 %v305
    %381 = vmatpush1.msra.mxu0 %v304
    %382 = vmatprep.subr.mxu0 %v307
    %383 = vmatpush1.msra.mxu0 %v306
    %384 = vmatprep.subr.mxu0 %v309
    %385 = vmatpush1.msra.mxu0 %v308
    %386 = vmatprep.subr.mxu0 %v311
    %387 = vmatpush1.msra.mxu0 %v310
    %388 = vmatprep.subr.mxu0 %v313
    %389 = vmatpush1.msra.mxu0 %v312
    %390 = vmatprep.subr.mxu0 %v315
    %391 = vmatpush1.msra.mxu0 %v314
    %392 = vmatprep.subr.mxu0 %v317
    %393 = vmatpush1.msra.mxu0 %v316
    %394 = vmatprep.subr.mxu0 %v319
    %395 = vmatpush1.msra.mxu0 %v318
    %396 = vmatprep.subr.mxu0 %v321
    %397 = vmatpush1.msra.mxu0 %v320
    %398 = vmatprep.subr.mxu0 %v323
    %399 = vmatpush1.msra.mxu0 %v322
    %400 = vmatprep.mubr.f32.mxu0 %v258
    %401 = vmatmul.mubr.f32.gmra.mrb[0].mxu0 %v257
    %v402 = vpop.f32.mrb[0].mxu0
    %v403 = vadd.f32 0.0, %v402
    %v404 = vpop.f32.mrb[0].mxu0
    %v405 = vadd.f32 0.0, %v404
    %406 = vdwg.mxu0
    %407 = vmatprep.subr.mxu0 %v325
    %408 = vmatpush1.msra.mxu0 %v324
    %409 = vmatprep.subr.mxu0 %v327
    %410 = vmatpush1.msra.mxu0 %v326
    %411 = vmatprep.subr.mxu0 %v329
    %412 = vmatpush1.msra.mxu0 %v328
    %413 = vmatprep.subr.mxu0 %v331
    %414 = vmatpush1.msra.mxu0 %v330
    %415 = vmatprep.subr.mxu0 0.0
    %416 = vmatpush1.msra.mxu0 0.0
    %417 = vmatprep.subr.mxu0 0.0
    %418 = vmatpush1.msra.mxu0 0.0
    %419 = vmatprep.subr.mxu0 0.0
    %420 = vmatpush1.msra.mxu0 0.0
    %421 = vmatprep.subr.mxu0 0.0
    %422 = vmatpush1.msra.mxu0 0.0
    %423 = vmatprep.subr.mxu0 0.0
    %424 = vmatpush1.msra.mxu0 0.0
    %425 = vmatprep.subr.mxu0 0.0
    %426 = vmatpush1.msra.mxu0 0.0
    %427 = vmatprep.subr.mxu0 0.0
    %428 = vmatpush1.msra.mxu0 0.0
    %429 = vmatprep.subr.mxu0 0.0
    %430 = vmatpush1.msra.mxu0 0.0
    %431 = vmatprep.subr.mxu0 0.0
    %432 = vmatpush1.msra.mxu0 0.0
    %433 = vmatprep.subr.mxu0 0.0
    %434 = vmatpush1.msra.mxu0 0.0
    %435 = vmatprep.subr.mxu0 0.0
    %436 = vmatpush1.msra.mxu0 0.0
    %437 = vmatprep.subr.mxu0 0.0
    %438 = vmatpush1.msra.mxu0 0.0
    %439 = vmatprep.subr.mxu0 0.0
    %440 = vmatpush1.msra.mxu0 0.0
    %441 = vmatprep.subr.mxu0 0.0
    %442 = vmatpush1.msra.mxu0 0.0
    %443 = vmatprep.subr.mxu0 0.0
    %444 = vmatpush1.msra.mxu0 0.0
    %445 = vmatprep.subr.mxu0 0.0
    %446 = vmatpush1.msra.mxu0 0.0
    %447 = vmatprep.subr.mxu0 0.0
    %448 = vmatpush1.msra.mxu0 0.0
    %449 = vmatprep.subr.mxu0 0.0
    %450 = vmatpush1.msra.mxu0 0.0
    %451 = vmatprep.subr.mxu0 0.0
    %452 = vmatpush1.msra.mxu0 0.0
    %453 = vmatprep.subr.mxu0 0.0
    %454 = vmatpush1.msra.mxu0 0.0
    %455 = vmatprep.subr.mxu0 0.0
    %456 = vmatpush1.msra.mxu0 0.0
    %457 = vmatprep.subr.mxu0 0.0
    %458 = vmatpush1.msra.mxu0 0.0
    %459 = vmatprep.subr.mxu0 0.0
    %460 = vmatpush1.msra.mxu0 0.0
    %461 = vmatprep.subr.mxu0 0.0
    %462 = vmatpush1.msra.mxu0 0.0
    %463 = vmatprep.subr.mxu0 0.0
    %464 = vmatpush1.msra.mxu0 0.0
    %465 = vmatprep.subr.mxu0 0.0
    %466 = vmatpush1.msra.mxu0 0.0
    %467 = vmatprep.subr.mxu0 0.0
    %468 = vmatpush1.msra.mxu0 0.0
    %469 = vmatprep.subr.mxu0 0.0
    %470 = vmatpush1.msra.mxu0 0.0
    %471 = vmatprep.mubr.f32.mxu0 0.0
    %472 = vmatmul.mubr.f32.gmra.mrb[0].mxu0 %v334
    %v473 = vpop.f32.mrb[0].mxu0
    %v474 = vadd.f32 %v403, %v473
    %v475 = vpop.f32.mrb[0].mxu0
    %v476 = vadd.f32 %v405, %v475
    %477 = vdwg.mxu0
    %v478 = vld [vmem:[%s4] sm:$0xff]
    %v479 = vld [vmem:[%s4 + $0x8] sm:$0xff]
    %v480 = vld [vmem:[%s4 + $0x10] sm:$0xff]
    %v481 = vld [vmem:[%s4 + $0x18] sm:$0xff]
    %v482 = vld [vmem:[%s4 + $0x20] sm:$0xff]
    %v483 = vld [vmem:[%s4 + $0x28] sm:$0xff]
    %v484 = vld [vmem:[%s4 + $0x30] sm:$0xff]
    %v485 = vld [vmem:[%s4 + $0x38] sm:$0xff]
    %v486 = vld [vmem:[%s4 + $0x40] sm:$0xff]
    %v487 = vld [vmem:[%s4 + $0x48] sm:$0xff]
    %v488 = vld [vmem:[%s4 + $0x50] sm:$0xff]
    %v489 = vld [vmem:[%s4 + $0x58] sm:$0xff]
    %v490 = vld [vmem:[%s4 + $0x60] sm:$0xff]
    %v491 = vld [vmem:[%s4 + $0x68] sm:$0xff]
    %v492 = vld [vmem:[%s4 + $0x70] sm:$0xff]
    %v493 = vld [vmem:[%s4 + $0x78] sm:$0xff]
    %v494 = vld [vmem:[%s4 + $0x80] sm:$0xff]
    %v495 = vld [vmem:[%s4 + $0x88] sm:$0xff]
    %v496 = vld [vmem:[%s4 + $0x90] sm:$0xff]
    %v497 = vld [vmem:[%s4 + $0x98] sm:$0xff]
    %v498 = vld [vmem:[%s4 + $0xa0] sm:$0xff]
    %v499 = vld [vmem:[%s4 + $0xa8] sm:$0xff]
    %v500 = vld [vmem:[%s4 + $0xb0] sm:$0xff]
    %v501 = vld [vmem:[%s4 + $0xb8] sm:$0xff]
    %v502 = vld [vmem:[%s4 + $0xc0] sm:$0xff]
    %v503 = vld [vmem:[%s4 + $0xc8] sm:$0xff]
    %v504 = vld [vmem:[%s4 + $0xd0] sm:$0xff]
    %v505 = vld [vmem:[%s4 + $0xd8] sm:$0xff]
    %v506 = vld [vmem:[%s4 + $0xe0] sm:$0xff]
    %v507 = vld [vmem:[%s4 + $0xe8] sm:$0xff]
    %v508 = vld [vmem:[%s4 + $0xf0] sm:$0xff]
    %v509 = vld [vmem:[%s4 + $0xf8] sm:$0xff]
    %v510 = vld [vmem:[%s4 + $0x100] sm:$0xff]
    %v511 = vld [vmem:[%s4 + $0x108] sm:$0xff]
    %v512 = vld [vmem:[%s4 + $0x110] sm:$0xff]
    %v513 = vld [vmem:[%s4 + $0x118] sm:$0xff]
    %v514 = vrot.slane %v474, 4
    %v515 = vadd.f32 %v474, %v514
    %v516 = vrot.slane %v515, 2
    %v517 = vadd.f32 %v515, %v516
    %v518 = vrot.slane %v517, 1
    %v519 = vadd.f32 %v517, %v518
    %v520 = vsel %vm112, %v476, 0.0
    %v521 = vrot.slane %v520, 4
    %v522 = vadd.f32 %v520, %v521
    %v523 = vrot.slane %v522, 2
    %v524 = vadd.f32 %v522, %v523
    %v525 = vrot.slane %v524, 1
    %v526 = vadd.f32 %v524, %v525
    %v528 = vsel %vm112, %v526, 0
    %530 = vmatprep.subr.mxu0 %v479
    %531 = vmatpush1.msra.mxu0 %v478
    %532 = vmatprep.subr.mxu0 %v481
    %533 = vmatpush1.msra.mxu0 %v480
    %534 = vmatprep.subr.mxu0 %v483
    %535 = vmatpush1.msra.mxu0 %v482
    %536 = vmatprep.subr.mxu0 %v485
    %537 = vmatpush1.msra.mxu0 %v484
    %538 = vmatprep.subr.mxu0 %v487
    %539 = vmatpush1.msra.mxu0 %v486
    %540 = vmatprep.subr.mxu0 %v489
    %541 = vmatpush1.msra.mxu0 %v488
    %542 = vmatprep.subr.mxu0 %v491
    %543 = vmatpush1.msra.mxu0 %v490
    %544 = vmatprep.subr.mxu0 %v493
    %545 = vmatpush1.msra.mxu0 %v492
    %546 = vmatprep.subr.mxu0 %v495
    %547 = vmatpush1.msra.mxu0 %v494
    %548 = vmatprep.subr.mxu0 %v497
    %549 = vmatpush1.msra.mxu0 %v496
    %550 = vmatprep.subr.mxu0 %v499
    %551 = vmatpush1.msra.mxu0 %v498
    %552 = vmatprep.subr.mxu0 %v501
    %553 = vmatpush1.msra.mxu0 %v500
    %554 = vmatprep.subr.mxu0 %v503
    %555 = vmatpush1.msra.mxu0 %v502
    %556 = vmatprep.subr.mxu0 %v505
    %557 = vmatpush1.msra.mxu0 %v504
    %558 = vmatprep.subr.mxu0 %v507
    %559 = vmatpush1.msra.mxu0 %v506
    %560 = vmatprep.subr.mxu0 %v509
    %561 = vmatpush1.msra.mxu0 %v508
    %562 = vmatprep.subr.mxu0 %v511
    %563 = vmatpush1.msra.mxu0 %v510
    %564 = vmatprep.subr.mxu0 %v513
    %565 = vmatpush1.msra.mxu0 %v512
    %566 = vmatprep.subr.mxu0 0.0
    %567 = vmatpush1.msra.mxu0 0.0
    %568 = vmatprep.subr.mxu0 0.0
    %569 = vmatpush1.msra.mxu0 0.0
    %570 = vmatprep.subr.mxu0 0.0
    %571 = vmatpush1.msra.mxu0 0.0
    %572 = vmatprep.subr.mxu0 0.0
    %573 = vmatpush1.msra.mxu0 0.0
    %574 = vmatprep.subr.mxu0 0.0
    %575 = vmatpush1.msra.mxu0 0.0
    %576 = vmatprep.subr.mxu0 0.0
    %577 = vmatpush1.msra.mxu0 0.0
    %578 = vmatprep.subr.mxu0 0.0
    %579 = vmatpush1.msra.mxu0 0.0
    %580 = vmatprep.subr.mxu0 0.0
    %581 = vmatpush1.msra.mxu0 0.0
    %582 = vmatprep.subr.mxu0 0.0
    %583 = vmatpush1.msra.mxu0 0.0
    %584 = vmatprep.subr.mxu0 0.0
    %585 = vmatpush1.msra.mxu0 0.0
    %586 = vmatprep.subr.mxu0 0.0
    %587 = vmatpush1.msra.mxu0 0.0
    %588 = vmatprep.subr.mxu0 0.0
    %589 = vmatpush1.msra.mxu0 0.0
    %590 = vmatprep.subr.mxu0 0.0
    %591 = vmatpush1.msra.mxu0 0.0
    %592 = vmatprep.subr.mxu0 0.0
    %593 = vmatpush1.msra.mxu0 0.0
    %594 = vmatprep.mubr.f32.mxu0 %v528
    %595 = vmatmul.mubr.f32.gmra.mrb[0].mxu0 %v519
    %v596 = vpop.f32.mrb[0].mxu0
    %v597 = vadd.f32 0.0, %v596
    %v598 = vpop.f32.mrb[0].mxu0
    %v599 = vadd.f32 0.0, %v598
    %600 = vdwg.mxu0
    %v601 = vmul.f32 %v597, 0.013888889
    %v602 = vmul.f32 %v599, 0.013888889
    %v603 = vlaneseq
    %v604 = vshrl.u32 %v603, 7
    %v605 = vsub.s32 0, %v604
    %v606 = vrot.slane %v601, %v605
    %v607 = vlaneseq
    %v608 = vshrl.u32 %v607, 7
    %v609 = vsub.s32 0, %v608
    %v610 = vrot.slane %v602, %v609
    %v611 = vsub.f32 %v474, %v606
    %v612 = vsub.f32 %v476, %v610
    %v613 = vmul.f32 %v611, %v611
    %v614 = vmul.f32 %v612, %v612
    %v615 = vrot.slane %v613, 4
    %v616 = vadd.f32 %v613, %v615
    %v617 = vrot.slane %v616, 2
    %v618 = vadd.f32 %v616, %v617
    %v619 = vrot.slane %v618, 1
    %v620 = vadd.f32 %v618, %v619
    %v621 = vsel %vm112, %v614, 0.0
    %v622 = vrot.slane %v621, 4
    %v623 = vadd.f32 %v621, %v622
    %v624 = vrot.slane %v623, 2
    %v625 = vadd.f32 %v623, %v624
    %v626 = vrot.slane %v625, 1
    %v627 = vadd.f32 %v625, %v626
    %v629 = vsel %vm112, %v627, 0
    %631 = vmatprep.subr.mxu0 %v479
    %632 = vmatpush1.msra.mxu0 %v478
    %633 = vmatprep.subr.mxu0 %v481
    %634 = vmatpush1.msra.mxu0 %v480
    %635 = vmatprep.subr.mxu0 %v483
    %636 = vmatpush1.msra.mxu0 %v482
    %637 = vmatprep.subr.mxu0 %v485
    %638 = vmatpush1.msra.mxu0 %v484
    %639 = vmatprep.subr.mxu0 %v487
    %640 = vmatpush1.msra.mxu0 %v486
    %641 = vmatprep.subr.mxu0 %v489
    %642 = vmatpush1.msra.mxu0 %v488
    %643 = vmatprep.subr.mxu0 %v491
    %644 = vmatpush1.msra.mxu0 %v490
    %645 = vmatprep.subr.mxu0 %v493
    %646 = vmatpush1.msra.mxu0 %v492
    %647 = vmatprep.subr.mxu0 %v495
    %648 = vmatpush1.msra.mxu0 %v494
    %649 = vmatprep.subr.mxu0 %v497
    %650 = vmatpush1.msra.mxu0 %v496
    %651 = vmatprep.subr.mxu0 %v499
    %652 = vmatpush1.msra.mxu0 %v498
    %653 = vmatprep.subr.mxu0 %v501
    %654 = vmatpush1.msra.mxu0 %v500
    %655 = vmatprep.subr.mxu0 %v503
    %656 = vmatpush1.msra.mxu0 %v502
    %657 = vmatprep.subr.mxu0 %v505
    %658 = vmatpush1.msra.mxu0 %v504
    %659 = vmatprep.subr.mxu0 %v507
    %660 = vmatpush1.msra.mxu0 %v506
    %661 = vmatprep.subr.mxu0 %v509
    %662 = vmatpush1.msra.mxu0 %v508
    %663 = vmatprep.subr.mxu0 %v511
    %664 = vmatpush1.msra.mxu0 %v510
    %665 = vmatprep.subr.mxu0 %v513
    %666 = vmatpush1.msra.mxu0 %v512
    %667 = vmatprep.subr.mxu0 0.0
    %668 = vmatpush1.msra.mxu0 0.0
    %669 = vmatprep.subr.mxu0 0.0
    %670 = vmatpush1.msra.mxu0 0.0
    %671 = vmatprep.subr.mxu0 0.0
    %672 = vmatpush1.msra.mxu0 0.0
    %673 = vmatprep.subr.mxu0 0.0
    %674 = vmatpush1.msra.mxu0 0.0
    %675 = vmatprep.subr.mxu0 0.0
    %676 = vmatpush1.msra.mxu0 0.0
    %677 = vmatprep.subr.mxu0 0.0
    %678 = vmatpush1.msra.mxu0 0.0
    %679 = vmatprep.subr.mxu0 0.0
    %680 = vmatpush1.msra.mxu0 0.0
    %681 = vmatprep.subr.mxu0 0.0
    %682 = vmatpush1.msra.mxu0 0.0
    %683 = vmatprep.subr.mxu0 0.0
    %684 = vmatpush1.msra.mxu0 0.0
    %685 = vmatprep.subr.mxu0 0.0
    %686 = vmatpush1.msra.mxu0 0.0
    %687 = vmatprep.subr.mxu0 0.0
    %688 = vmatpush1.msra.mxu0 0.0
    %689 = vmatprep.subr.mxu0 0.0
    %690 = vmatpush1.msra.mxu0 0.0
    %691 = vmatprep.subr.mxu0 0.0
    %692 = vmatpush1.msra.mxu0 0.0
    %693 = vmatprep.subr.mxu0 0.0
    %694 = vmatpush1.msra.mxu0 0.0
    %695 = vmatprep.mubr.f32.mxu0 %v629
    %696 = vmatmul.mubr.f32.gmra.mrb[0].mxu0 %v620
    %v697 = vpop.f32.mrb[0].mxu0
    %v698 = vadd.f32 0.0, %v697
    %v699 = vpop.f32.mrb[0].mxu0
    %v700 = vadd.f32 0.0, %v699
    %701 = vdwg.mxu0
    %v702 = vmul.f32 %v698, 0.013888889
    %v703 = vmul.f32 %v700, 0.013888889
    %v704 = vadd.f32 %v702, 1e-05
    %v705 = vadd.f32 %v703, 1e-05
    %v706 = vrsqrt.pop %v704
    %v707 = vrsqrt.pop %v705
    %v708 = vlaneseq
    %v709 = vshrl.u32 %v708, 7
    %v710 = vsub.s32 0, %v709
    %v711 = vrot.slane %v706, %v710
    %v712 = vlaneseq
    %v713 = vshrl.u32 %v712, 7
    %v714 = vsub.s32 0, %v713
    %v715 = vrot.slane %v707, %v714
    %v716 = vmul.f32 %v611, %v711
    %v717 = vmul.f32 %v612, %v715
    %v718 = vld [vmem:[%s5] sm:$0x3]
    %v720 = vlaneseq
    %v721 = vshrl.u32 %v720, 7
    %v722 = vsub.s32 0, %v721
    %v723 = vrot.slane %v718, %v722
    %v724 = vlaneseq
    %v725 = vshrl.u32 %v724, 7
    %v726 = vsub.s32 1, %v725
    %v727 = vrot.slane %v718, %v726
    %v730 = vmul.f32 %v716, %v723
    %v731 = vmul.f32 %v717, %v727
    %v732 = vld [vmem:[%s6] sm:$0x3]
    %v734 = vlaneseq
    %v735 = vshrl.u32 %v734, 7
    %v736 = vsub.s32 0, %v735
    %v737 = vrot.slane %v732, %v736
    %v738 = vlaneseq
    %v739 = vshrl.u32 %v738, 7
    %v740 = vsub.s32 1, %v739
    %v741 = vrot.slane %v732, %v740
    %v744 = vadd.f32 %v730, %v737
    %v745 = vadd.f32 %v731, %v741
    %v746 = vmax.f32 %v744, 0.0
    %v747 = vmax.f32 %v745, 0.0
    %v748 = vld [vmem:[%s7] sm:$0xff]
    %v749 = vld [vmem:[%s7 + $0x8] sm:$0xff]
    %v750 = vld [vmem:[%s7 + $0x10] sm:$0xff]
    %v751 = vld [vmem:[%s7 + $0x18] sm:$0xff]
    %v752 = vld [vmem:[%s7 + $0x20] sm:$0xff]
    %v753 = vld [vmem:[%s7 + $0x28] sm:$0xff]
    %v754 = vld [vmem:[%s7 + $0x30] sm:$0xff]
    %v755 = vld [vmem:[%s7 + $0x38] sm:$0xff]
    %v756 = vld [vmem:[%s7 + $0x40] sm:$0xff]
    %v757 = vld [vmem:[%s7 + $0x48] sm:$0xff]
    %v758 = vld [vmem:[%s7 + $0x50] sm:$0xff]
    %v759 = vld [vmem:[%s7 + $0x58] sm:$0xff]
    %v760 = vld [vmem:[%s7 + $0x60] sm:$0xff]
    %v761 = vld [vmem:[%s7 + $0x68] sm:$0xff]
    %v762 = vld [vmem:[%s7 + $0x70] sm:$0xff]
    %v763 = vld [vmem:[%s7 + $0x78] sm:$0xff]
    %v764 = vld [vmem:[%s7 + $0x80] sm:$0xff]
    %v765 = vld [vmem:[%s7 + $0x88] sm:$0xff]
    %v766 = vld [vmem:[%s8] sm:$0x1]
    %v768 = vlaneseq
    %v769 = vshrl.u32 %v768, 7
    %v770 = vsub.s32 0, %v769
    %v771 = vrot.slane %v766, %v770
    %v774 = vsel %vm112, %v747, 0
    %776 = vmatprep.subr.mxu0 0.0
    %777 = vmatpush1.msra.mxu0 %v748
    %778 = vmatprep.subr.mxu0 0.0
    %779 = vmatpush1.msra.mxu0 %v749
    %780 = vmatprep.subr.mxu0 0.0
    %781 = vmatpush1.msra.mxu0 %v750
    %782 = vmatprep.subr.mxu0 0.0
    %783 = vmatpush1.msra.mxu0 %v751
    %784 = vmatprep.subr.mxu0 0.0
    %785 = vmatpush1.msra.mxu0 %v752
    %786 = vmatprep.subr.mxu0 0.0
    %787 = vmatpush1.msra.mxu0 %v753
    %788 = vmatprep.subr.mxu0 0.0
    %789 = vmatpush1.msra.mxu0 %v754
    %790 = vmatprep.subr.mxu0 0.0
    %791 = vmatpush1.msra.mxu0 %v755
    %792 = vmatprep.subr.mxu0 0.0
    %793 = vmatpush1.msra.mxu0 %v756
    %794 = vmatprep.subr.mxu0 0.0
    %795 = vmatpush1.msra.mxu0 %v757
    %796 = vmatprep.subr.mxu0 0.0
    %797 = vmatpush1.msra.mxu0 %v758
    %798 = vmatprep.subr.mxu0 0.0
    %799 = vmatpush1.msra.mxu0 %v759
    %800 = vmatprep.subr.mxu0 0.0
    %801 = vmatpush1.msra.mxu0 %v760
    %802 = vmatprep.subr.mxu0 0.0
    %803 = vmatpush1.msra.mxu0 %v761
    %804 = vmatprep.subr.mxu0 0.0
    %805 = vmatpush1.msra.mxu0 %v762
    %806 = vmatprep.subr.mxu0 0.0
    %807 = vmatpush1.msra.mxu0 %v763
    %808 = vmatprep.subr.mxu0 0.0
    %809 = vmatpush1.msra.mxu0 %v764
    %810 = vmatprep.subr.mxu0 0.0
    %811 = vmatpush1.msra.mxu0 %v765
    %812 = vmatprep.subr.mxu0 0.0
    %813 = vmatpush1.msra.mxu0 0.0
    %814 = vmatprep.subr.mxu0 0.0
    %815 = vmatpush1.msra.mxu0 0.0
    %816 = vmatprep.subr.mxu0 0.0
    %817 = vmatpush1.msra.mxu0 0.0
    %818 = vmatprep.subr.mxu0 0.0
    %819 = vmatpush1.msra.mxu0 0.0
    %820 = vmatprep.subr.mxu0 0.0
    %821 = vmatpush1.msra.mxu0 0.0
    %822 = vmatprep.subr.mxu0 0.0
    %823 = vmatpush1.msra.mxu0 0.0
    %824 = vmatprep.subr.mxu0 0.0
    %825 = vmatpush1.msra.mxu0 0.0
    %826 = vmatprep.subr.mxu0 0.0
    %827 = vmatpush1.msra.mxu0 0.0
    %828 = vmatprep.subr.mxu0 0.0
    %829 = vmatpush1.msra.mxu0 0.0
    %830 = vmatprep.subr.mxu0 0.0
    %831 = vmatpush1.msra.mxu0 0.0
    %832 = vmatprep.subr.mxu0 0.0
    %833 = vmatpush1.msra.mxu0 0.0
    %834 = vmatprep.subr.mxu0 0.0
    %835 = vmatpush1.msra.mxu0 0.0
    %836 = vmatprep.subr.mxu0 0.0
    %837 = vmatpush1.msra.mxu0 0.0
    %838 = vmatprep.subr.mxu0 0.0
    %839 = vmatpush1.msra.mxu0 0.0
    %840 = vmatprep.mubr.f32.mxu0 %v774
    %841 = vmatmul.mubr.f32.gmra.mrb[0].mxu0 %v746
    %v842 = vpop.f32.mrb[0].mxu0
    %v843 = vadd.f32 %v771, %v842
    %v844 = vpop.f32.mrb[0].mxu0
    %845 = vdwg.mxu0
    %v846 = vmax.f32 %v843, 0.0
    %v847 = vld [vmem:[%s9] sm:$0xff]
    %v848 = vld [vmem:[%s9 + $0x8] sm:$0xff]
    %v849 = vld [vmem:[%s9 + $0x10] sm:$0xff]
    %v850 = vld [vmem:[%s9 + $0x18] sm:$0xff]
    %v851 = vld [vmem:[%s9 + $0x20] sm:$0xff]
    %v852 = vld [vmem:[%s9 + $0x28] sm:$0xff]
    %v853 = vld [vmem:[%s9 + $0x30] sm:$0xff]
    %v854 = vld [vmem:[%s9 + $0x38] sm:$0xff]
    %v855 = vld [vmem:[%s9 + $0x40] sm:$0xff]
    %v856 = vld [vmem:[%s9 + $0x48] sm:$0xff]
    %v857 = vld [vmem:[%s9 + $0x50] sm:$0xff]
    %v858 = vld [vmem:[%s9 + $0x58] sm:$0xff]
    %v859 = vld [vmem:[%s9 + $0x60] sm:$0xff]
    %v860 = vld [vmem:[%s9 + $0x68] sm:$0xff]
    %v861 = vld [vmem:[%s9 + $0x70] sm:$0xff]
    %v862 = vld [vmem:[%s9 + $0x78] sm:$0xff]
    %v863 = vld [vmem:[%s10] sm:$0x1]
    %v865 = vlaneseq
    %v866 = vshrl.u32 %v865, 7
    %v867 = vsub.s32 0, %v866
    %v868 = vrot.slane %v863, %v867
    %870 = vmatprep.subr.mxu0 0.0
    %871 = vmatpush1.msra.mxu0 %v847
    %872 = vmatprep.subr.mxu0 0.0
    %873 = vmatpush1.msra.mxu0 %v848
    %874 = vmatprep.subr.mxu0 0.0
    %875 = vmatpush1.msra.mxu0 %v849
    %876 = vmatprep.subr.mxu0 0.0
    %877 = vmatpush1.msra.mxu0 %v850
    %878 = vmatprep.subr.mxu0 0.0
    %879 = vmatpush1.msra.mxu0 %v851
    %880 = vmatprep.subr.mxu0 0.0
    %881 = vmatpush1.msra.mxu0 %v852
    %882 = vmatprep.subr.mxu0 0.0
    %883 = vmatpush1.msra.mxu0 %v853
    %884 = vmatprep.subr.mxu0 0.0
    %885 = vmatpush1.msra.mxu0 %v854
    %886 = vmatprep.subr.mxu0 0.0
    %887 = vmatpush1.msra.mxu0 %v855
    %888 = vmatprep.subr.mxu0 0.0
    %889 = vmatpush1.msra.mxu0 %v856
    %890 = vmatprep.subr.mxu0 0.0
    %891 = vmatpush1.msra.mxu0 %v857
    %892 = vmatprep.subr.mxu0 0.0
    %893 = vmatpush1.msra.mxu0 %v858
    %894 = vmatprep.subr.mxu0 0.0
    %895 = vmatpush1.msra.mxu0 %v859
    %896 = vmatprep.subr.mxu0 0.0
    %897 = vmatpush1.msra.mxu0 %v860
    %898 = vmatprep.subr.mxu0 0.0
    %899 = vmatpush1.msra.mxu0 %v861
    %900 = vmatprep.subr.mxu0 0.0
    %901 = vmatpush1.msra.mxu0 %v862
    %902 = vmatprep.subr.mxu0 0.0
    %903 = vmatpush1.msra.mxu0 0.0
    %904 = vmatprep.subr.mxu0 0.0
    %905 = vmatpush1.msra.mxu0 0.0
    %906 = vmatprep.subr.mxu0 0.0
    %907 = vmatpush1.msra.mxu0 0.0
    %908 = vmatprep.subr.mxu0 0.0
    %909 = vmatpush1.msra.mxu0 0.0
    %910 = vmatprep.subr.mxu0 0.0
    %911 = vmatpush1.msra.mxu0 0.0
    %912 = vmatprep.subr.mxu0 0.0
    %913 = vmatpush1.msra.mxu0 0.0
    %914 = vmatprep.subr.mxu0 0.0
    %915 = vmatpush1.msra.mxu0 0.0
    %916 = vmatprep.subr.mxu0 0.0
    %917 = vmatpush1.msra.mxu0 0.0
    %918 = vmatprep.subr.mxu0 0.0
    %919 = vmatpush1.msra.mxu0 0.0
    %920 = vmatprep.subr.mxu0 0.0
    %921 = vmatpush1.msra.mxu0 0.0
    %922 = vmatprep.subr.mxu0 0.0
    %923 = vmatpush1.msra.mxu0 0.0
    %924 = vmatprep.subr.mxu0 0.0
    %925 = vmatpush1.msra.mxu0 0.0
    %926 = vmatprep.subr.mxu0 0.0
    %927 = vmatpush1.msra.mxu0 0.0
    %928 = vmatprep.subr.mxu0 0.0
    %929 = vmatpush1.msra.mxu0 0.0
    %930 = vmatprep.subr.mxu0 0.0
    %931 = vmatpush1.msra.mxu0 0.0
    %932 = vmatprep.subr.mxu0 0.0
    %933 = vmatpush1.msra.mxu0 0.0
    %934 = vmatprep.mubr.f32.mxu0 0.0
    %935 = vmatmul.mubr.f32.gmra.mrb[0].mxu0 %v846
    %v936 = vpop.f32.mrb[0].mxu0
    %v937 = vadd.f32 %v868, %v936
    %v938 = vpop.f32.mrb[0].mxu0
    %939 = vdwg.mxu0
    %vm940 = vcmask 121856
    %941 = vst.msk [vmem:[#allocation2] sm:$0xff] %vm940, %v937
    // Predicated region
    $region46: #{encoder2l_forward.1} parent=1 // pred_check
      _
    $region47: #{encoder2l_forward.1} parent=1 // pred_check_branch
      %943 = sbr.rel (0) target = $region49
    $region48: #{encoder2l_forward.1} parent=1 // pred_region
      %s945 = ssub.s32 128, 128
      %946 = vsyncadd [#allocation3], %s945
      %s948 = sshll.u32 [#allocation2], 4
      %s949 = int_to_ptr.vmem [resolvable:$true] %s948
      %951 = dma.vmem_to_hbm [thread:$0]  %s949, 128, %s11, [#allocation3]
    $region49: #{encoder2l_forward.1} parent=1 // pred_fallthru
      _
    // Predicated region
    $region50: #{encoder2l_forward.1} parent=1 // pred_check
      _
    $region51: #{encoder2l_forward.1} parent=1 // pred_check_branch
      %953 = sbr.rel (0) target = $region53
    $region52: #{encoder2l_forward.1} parent=1 // pred_region
      %954 = dma.done [#allocation3], 128
    $region53: #{encoder2l_forward.1} parent=1 // pred_fallthru
      _
    %955 = vsyncpa [#allocation3], 1

</llo_original>
